<compile_context>
chip_gen: v7x
topology: tpu7x:2x2x1
jax: 0.10.0
libtpu: 0.0.40
codegen_flags: <defaults>
</compile_context>

<pallas_src>
import jax
import jax.numpy as jnp
from jax.experimental import pallas as pl
from jax.experimental.pallas import tpu as pltpu

IN_F, HID_F, OUT_F = 2, 3, 1     # logical sizes (nn.Linear(2,3), nn.Linear(3,1))
SUB = 8                          # sublane-padded feature rows of the input tile
LANE = 128                       # lane quantum
MAX_B_BLK = 2048                 # batch-tile cap: 2048 lanes * 32 B ~= 64 KiB/tile;
                                 # fits scoped VMEM with double-buffering on every
                                 # generation yet amortizes the ~0.35 us/step grid
                                 # overhead.


def _mlp_kernel(p_ref, x_ref, o_ref):
    """relu(x@W1+b1) -> sigmoid(.@W2+b2); batch on lanes, params in SMEM.

    p_ref layout (flat f32[13] in SMEM):
      p[0:3]  = W1[input feature 0 -> hidden 0..2]
      p[3:6]  = W1[input feature 1 -> hidden 0..2]
      p[6:9]  = b1
      p[9:12] = W2[hidden 0..2 -> output]
      p[12]   = b2
    """
    x0 = x_ref[0:1, :]                       # (1, B_BLK): feature 0, batch on lanes
    x1 = x_ref[1:2, :]                       # (1, B_BLK): feature 1
    z = jnp.zeros_like(x0) + p_ref[12]       # b2 broadcast
    for j in range(HID_F):                   # 3 hidden units, static unroll (VPU FMAs)
        h = p_ref[j] * x0 + p_ref[HID_F + j] * x1 + p_ref[2 * HID_F + j]
        z = z + p_ref[3 * HID_F + j] * jnp.maximum(h, 0.0)
    o_ref[...] = jax.nn.sigmoid(z)           # EUP; garbage in padded lanes is sliced off


def _round_up(n, m):
    return ((n + m - 1) // m) * m


@jax.jit
def simple_nn_forward(x, w1, b1, w2, b2):
    """x: (B, 2) f32.  w1: (2,3), b1: (3,), w2: (3,1), b2: (1,) stored (in, out)
    (transpose of PyTorch's nn.Linear weight).  Returns (B, 1) f32."""
    B = x.shape[0]
    b_blk = min(MAX_B_BLK, _round_up(B, LANE))
    bp = _round_up(B, b_blk)

    # Batch-on-lanes input tile: (8, Bp), rows 0/1 valid.  jnp.pad, no scatter.
    x_t = jnp.pad(x.astype(jnp.float32).T, ((0, SUB - IN_F), (0, bp - B)))

    # 13 scalar parameters, flat, destined for SMEM.
    params = jnp.concatenate(
        [w1[0, :], w1[1, :], b1, w2[:, 0], b2]).astype(jnp.float32)

    out_p = pl.pallas_call(
        _mlp_kernel,
        out_shape=jax.ShapeDtypeStruct((1, bp), jnp.float32),
        grid=(bp // b_blk,),
        in_specs=[
            pl.BlockSpec(memory_space=pltpu.MemorySpace.SMEM),   # params (13 scalars)
            pl.BlockSpec((SUB, b_blk), lambda i: (0, i)),        # x, batch-tiled
        ],
        out_specs=pl.BlockSpec((1, b_blk), lambda i: (0, i)),    # lane-dense output
        compiler_params=pltpu.CompilerParams(
            dimension_semantics=("parallel",)),
    )(params, x_t)

    return out_p[0, :B].reshape(B, OUT_F)


def init_params(key):
    """Deterministic init mimicking PyTorch nn.Linear default U(-1/sqrt(fan_in), +)."""
    k1, k2, k3, k4 = jax.random.split(key, 4)
    bound1 = 1.0 / jnp.sqrt(IN_F)
    bound2 = 1.0 / jnp.sqrt(HID_F)
    # Stored as (in, out): transpose of PyTorch's (out, in) weight layout.
    w1 = jax.random.uniform(k1, (IN_F, HID_F), jnp.float32, -bound1, bound1)
    b1 = jax.random.uniform(k2, (HID_F,), jnp.float32, -bound1, bound1)
    w2 = jax.random.uniform(k3, (HID_F, OUT_F), jnp.float32, -bound2, bound2)
    b2 = jax.random.uniform(k4, (OUT_F,), jnp.float32, -bound2, bound2)
    return w1, b1, w2, b2


def _reference(x, w1, b1, w2, b2):
    h = jnp.maximum(x @ w1 + b1, 0.0)
    return jax.nn.sigmoid(h @ w2 + b2)


if __name__ == "__main__":
    key = jax.random.PRNGKey(0)
    kx, kp = jax.random.split(key)

    batch = 8
    x = jax.random.normal(kx, (batch, IN_F), jnp.float32)
    w1, b1, w2, b2 = init_params(kp)

    out = simple_nn_forward(x, w1, b1, w2, b2)
    out = jax.block_until_ready(out)

    ref = _reference(x, w1, b1, w2, b2)
    assert out.shape == (batch, OUT_F), out.shape
    assert jnp.allclose(out, ref, atol=1e-5, rtol=1e-5), (out, ref)

    print("KERNEL_OK")
</pallas_src>

<mosaic_0001>
module attributes {stable_mosaic.version = 11 : i64} {
  func.func @_mlp_kernel(%arg0: i32, %arg1: memref<13xf32, #tpu.memory_space<smem>>, %arg2: memref<8x128xf32, #tpu.memory_space<vmem>>, %arg3: memref<1x128xf32, #tpu.memory_space<vmem>>) attributes {dimension_semantics = [#tpu.dimension_semantics<parallel>], iteration_bounds = array<i64: 1>, scalar_prefetch = 0 : i64, scratch_operands = 0 : i64, tpu.core_type = #tpu.core_type<tc>, window_params = [{transform_indices = @transform_0, window_bounds = array<i64: 13>}, {transform_indices = @transform_1, window_bounds = array<i64: 8, 128>}, {transform_indices = @transform_2, window_bounds = array<i64: 1, 128>}]} {
    %c0 = arith.constant 0 : index
    %c0_0 = arith.constant 0 : index
    %0 = vector.load %arg2[%c0, %c0_0] : memref<8x128xf32, #tpu.memory_space<vmem>>, vector<1x128xf32>
    %c1 = arith.constant 1 : index
    %c0_1 = arith.constant 0 : index
    %1 = vector.load %arg2[%c1, %c0_1] : memref<8x128xf32, #tpu.memory_space<vmem>>, vector<1x128xf32>
    %cst = arith.constant 0.000000e+00 : f32
    %2 = vector.broadcast %cst : f32 to vector<1x128xf32>
    %c12 = arith.constant 12 : index
    %3 = memref.load %arg1[%c12] : memref<13xf32, #tpu.memory_space<smem>>
    %4 = vector.broadcast %3 : f32 to vector<1x128xf32>
    %5 = arith.addf %2, %4 : vector<1x128xf32>
    %c0_2 = arith.constant 0 : index
    %6 = memref.load %arg1[%c0_2] : memref<13xf32, #tpu.memory_space<smem>>
    %7 = vector.broadcast %6 : f32 to vector<1x128xf32>
    %8 = arith.mulf %7, %0 : vector<1x128xf32>
    %c3 = arith.constant 3 : index
    %9 = memref.load %arg1[%c3] : memref<13xf32, #tpu.memory_space<smem>>
    %10 = vector.broadcast %9 : f32 to vector<1x128xf32>
    %11 = arith.mulf %10, %1 : vector<1x128xf32>
    %12 = arith.addf %8, %11 : vector<1x128xf32>
    %c6 = arith.constant 6 : index
    %13 = memref.load %arg1[%c6] : memref<13xf32, #tpu.memory_space<smem>>
    %14 = vector.broadcast %13 : f32 to vector<1x128xf32>
    %15 = arith.addf %12, %14 : vector<1x128xf32>
    %c9 = arith.constant 9 : index
    %16 = memref.load %arg1[%c9] : memref<13xf32, #tpu.memory_space<smem>>
    %cst_3 = arith.constant 0.000000e+00 : f32
    %17 = vector.broadcast %cst_3 : f32 to vector<1x128xf32>
    %18 = arith.maximumf %15, %17 : vector<1x128xf32>
    %19 = vector.broadcast %16 : f32 to vector<1x128xf32>
    %20 = arith.mulf %19, %18 : vector<1x128xf32>
    %21 = arith.addf %5, %20 : vector<1x128xf32>
    %c1_4 = arith.constant 1 : index
    %22 = memref.load %arg1[%c1_4] : memref<13xf32, #tpu.memory_space<smem>>
    %23 = vector.broadcast %22 : f32 to vector<1x128xf32>
    %24 = arith.mulf %23, %0 : vector<1x128xf32>
    %c4 = arith.constant 4 : index
    %25 = memref.load %arg1[%c4] : memref<13xf32, #tpu.memory_space<smem>>
    %26 = vector.broadcast %25 : f32 to vector<1x128xf32>
    %27 = arith.mulf %26, %1 : vector<1x128xf32>
    %28 = arith.addf %24, %27 : vector<1x128xf32>
    %c7 = arith.constant 7 : index
    %29 = memref.load %arg1[%c7] : memref<13xf32, #tpu.memory_space<smem>>
    %30 = vector.broadcast %29 : f32 to vector<1x128xf32>
    %31 = arith.addf %28, %30 : vector<1x128xf32>
    %c10 = arith.constant 10 : index
    %32 = memref.load %arg1[%c10] : memref<13xf32, #tpu.memory_space<smem>>
    %cst_5 = arith.constant 0.000000e+00 : f32
    %33 = vector.broadcast %cst_5 : f32 to vector<1x128xf32>
    %34 = arith.maximumf %31, %33 : vector<1x128xf32>
    %35 = vector.broadcast %32 : f32 to vector<1x128xf32>
    %36 = arith.mulf %35, %34 : vector<1x128xf32>
    %37 = arith.addf %21, %36 : vector<1x128xf32>
    %c2 = arith.constant 2 : index
    %38 = memref.load %arg1[%c2] : memref<13xf32, #tpu.memory_space<smem>>
    %39 = vector.broadcast %38 : f32 to vector<1x128xf32>
    %40 = arith.mulf %39, %0 : vector<1x128xf32>
    %c5 = arith.constant 5 : index
    %41 = memref.load %arg1[%c5] : memref<13xf32, #tpu.memory_space<smem>>
    %42 = vector.broadcast %41 : f32 to vector<1x128xf32>
    %43 = arith.mulf %42, %1 : vector<1x128xf32>
    %44 = arith.addf %40, %43 : vector<1x128xf32>
    %c8 = arith.constant 8 : index
    %45 = memref.load %arg1[%c8] : memref<13xf32, #tpu.memory_space<smem>>
    %46 = vector.broadcast %45 : f32 to vector<1x128xf32>
    %47 = arith.addf %44, %46 : vector<1x128xf32>
    %c11 = arith.constant 11 : index
    %48 = memref.load %arg1[%c11] : memref<13xf32, #tpu.memory_space<smem>>
    %cst_6 = arith.constant 0.000000e+00 : f32
    %49 = vector.broadcast %cst_6 : f32 to vector<1x128xf32>
    %50 = arith.maximumf %47, %49 : vector<1x128xf32>
    %51 = vector.broadcast %48 : f32 to vector<1x128xf32>
    %52 = arith.mulf %51, %50 : vector<1x128xf32>
    %53 = arith.addf %37, %52 : vector<1x128xf32>
    %54 = arith.negf %53 : vector<1x128xf32>
    %55 = math.exp %54 : vector<1x128xf32>
    %cst_7 = arith.constant 1.000000e+00 : f32
    %56 = vector.broadcast %cst_7 : f32 to vector<1x128xf32>
    %57 = arith.addf %56, %55 : vector<1x128xf32>
    %58 = arith.divf %56, %57 : vector<1x128xf32>
    %c0_8 = arith.constant 0 : index
    %c0_9 = arith.constant 0 : index
    %59 = vector.load %arg3[%c0_8, %c0_9] : memref<1x128xf32, #tpu.memory_space<vmem>>, vector<1x128xf32>
    tpu.vector_store %arg3[%c0_8, %c0_9], %58 {strides = array<i32>} : memref<1x128xf32, #tpu.memory_space<vmem>>, vector<1x128xf32>,
    return
  }
  func.func @transform_0(%arg0: i32) -> i32 {
    %c0_i32 = arith.constant 0 : i32
    %c0_i32_0 = arith.constant 0 : i32
    return %c0_i32 : i32
  }
  func.func @transform_1(%arg0: i32) -> (i32, i32) {
    %c0_i32 = arith.constant 0 : i32
    %c0_i32_0 = arith.constant 0 : i32
    return %c0_i32, %arg0 : i32, i32
  }
  func.func @transform_2(%arg0: i32) -> (i32, i32) {
    %c0_i32 = arith.constant 0 : i32
    %c0_i32_0 = arith.constant 0 : i32
    return %c0_i32, %arg0 : i32, i32
  }
}

</mosaic_0001>

<llo_original>
// kernel: simple_nn_forward.1
$region0: #{simple_nn_forward.1}
  #allocation0 [shape = 'u32[]', space=smem, size = 0x4, offset = 0x4, fixed_abs, tag = 'smem constant byte address 0x4 - core index']
  #allocation1 [shape = 'u32[144,128]{1,0:T(1,128)}', space=vmem, size = 0x12000, scoped, tag = 'internal scratch']
  %s0 = inlined_call_operand.vmem [shape: f32[13], index: 0, kind: input, shape index: {}]
  %s1 = inlined_call_operand.vmem [shape: f32[8,128], index: 1, kind: input, shape index: {}]
  %s2 = inlined_call_operand.vmem [shape: f32[1,128], index: 2, kind: output, shape index: {}]
  %s3 = sld [smem:[#allocation0]]
  $region22: #{simple_nn_forward.1} parent=0
    _
  %s5 = ssub.s32 1, %s3
  %s6 = scalar_select 0, %s5, %s3
  $region1: #{simple_nn_forward.1} parent=0
    #allocation2 [shape = 'u8[512]{0}', space=smem, size = 0x200, scoped, tag = 'input window, operand 0, single buffered']
    #allocation3 [shape = 's32[1]{0}', space=sflag, size = 0x4, scoped, tag = 'scoped memory for simple_nn_forward.1']
    %7 = vsyncpa [#allocation3], 0
    // Predicated region
    $region2: #{simple_nn_forward.1} parent=1 // pred_check
      _
    $region3: #{simple_nn_forward.1} parent=1 // pred_check_branch
      %9 = sbr.rel (0) target = $region5
    $region4: #{simple_nn_forward.1} parent=1 // pred_region
      %s11 = ssub.s32 16, 16
      %12 = vsyncadd [#allocation3], %s11
      %s14 = sshll.u32 %s0, 4
      %s15 = int_to_ptr.vmem [resolvable:$true] %s14
      %17 = dma.vmem_to_smem %s15, 16, [#allocation2], [#allocation3]
    $region5: #{simple_nn_forward.1} parent=1 // pred_fallthru
      _
    // Predicated region
    $region6: #{simple_nn_forward.1} parent=1 // pred_check
      _
    $region7: #{simple_nn_forward.1} parent=1 // pred_check_branch
      %19 = sbr.rel (0) target = $region9
    $region8: #{simple_nn_forward.1} parent=1 // pred_region
      _
    $region9: #{simple_nn_forward.1} parent=1 // pred_fallthru
      _
    // Predicated region
    $region10: #{simple_nn_forward.1} parent=1 // pred_check
      _
    $region11: #{simple_nn_forward.1} parent=1 // pred_check_branch
      %21 = sbr.rel (0) target = $region13
    $region12: #{simple_nn_forward.1} parent=1 // pred_region
      %22 = dma.done [#allocation3], 16
    $region13: #{simple_nn_forward.1} parent=1 // pred_fallthru
      _
    %23 = sfence
    %v24 = vld [vmem:[%s1] sm:$0x1]
    %v25 = vld [vmem:[%s1 + $0x1] sm:$0x1]
    %s26 = sld [smem:[#allocation2 + $0xc]]
    %v27 = vstv %s26
    %v28 = vadd.f32 %v27, 0.0
    %s29 = sld [smem:[#allocation2]]
    %v30 = vstv %s29
    %v31 = vmul.f32 %v30, %v24
    %s32 = sld [smem:[#allocation2 + $0x3]]
    %v33 = vstv %s32
    %v34 = vmul.f32 %v33, %v25
    %v35 = vadd.f32 %v31, %v34
    %s36 = sld [smem:[#allocation2 + $0x6]]
    %v37 = vstv %s36
    %v38 = vadd.f32 %v35, %v37
    %s39 = sld [smem:[#allocation2 + $0x9]]
    %v40 = vmax.f32 %v38, 0.0
    %v41 = vstv %s39
    %v42 = vmul.f32 %v41, %v40
    %v43 = vadd.f32 %v28, %v42
    %s44 = sld [smem:[#allocation2 + $0x1]]
    %v45 = vstv %s44
    %v46 = vmul.f32 %v45, %v24
    %s47 = sld [smem:[#allocation2 + $0x4]]
    %v48 = vstv %s47
    %v49 = vmul.f32 %v48, %v25
    %v50 = vadd.f32 %v46, %v49
    %s51 = sld [smem:[#allocation2 + $0x7]]
    %v52 = vstv %s51
    %v53 = vadd.f32 %v50, %v52
    %s54 = sld [smem:[#allocation2 + $0xa]]
    %v55 = vmax.f32 %v53, 0.0
    %v56 = vstv %s54
    %v57 = vmul.f32 %v56, %v55
    %v58 = vadd.f32 %v43, %v57
    %s59 = sld [smem:[#allocation2 + $0x2]]
    %v60 = vstv %s59
    %v61 = vmul.f32 %v60, %v24
    %s62 = sld [smem:[#allocation2 + $0x5]]
    %v63 = vstv %s62
    %v64 = vmul.f32 %v63, %v25
    %v65 = vadd.f32 %v61, %v64
    %s66 = sld [smem:[#allocation2 + $0x8]]
    %v67 = vstv %s66
    %v68 = vadd.f32 %v65, %v67
    %s69 = sld [smem:[#allocation2 + $0xb]]
    %v70 = vmax.f32 %v68, 0.0
    %v71 = vstv %s69
    %v72 = vmul.f32 %v71, %v70
    %v73 = vadd.f32 %v58, %v72
    %v74 = vxor.u32 %v73, 2147483648
    %v75 = vmul.f32 %v74, 1.442695
    %v76 = vpow.pop %v75
    %v77 = vadd.f32 %v76, 1.0
    %v78 = vrcp.pop %v77
    %v79 = vmul.f32 1.0, %v78
    %80 = vst [vmem:[%s2] sm:$0x1] %v79
    // Predicated region
    $region14: #{simple_nn_forward.1} parent=1 // pred_check
      _
    $region15: #{simple_nn_forward.1} parent=1 // pred_check_branch
      %82 = sbr.rel (0) target = $region17
    $region16: #{simple_nn_forward.1} parent=1 // pred_region
      _
    $region17: #{simple_nn_forward.1} parent=1 // pred_fallthru
      _
    // Predicated region
    $region18: #{simple_nn_forward.1} parent=1 // pred_check
      _
    $region19: #{simple_nn_forward.1} parent=1 // pred_check_branch
      %84 = sbr.rel (0) target = $region21
    $region20: #{simple_nn_forward.1} parent=1 // pred_region
      _
    $region21: #{simple_nn_forward.1} parent=1 // pred_fallthru
      _
    %85 = vsyncpa [#allocation3], 1

</llo_original>
